<compile_context>
chip_gen: v7x
topology: tpu7x:2x2x1
jax: 0.10.0
libtpu: 0.0.40
codegen_flags: <defaults>
</compile_context>

<pallas_src>
import functools
import math

import jax
import jax.numpy as jnp
from jax.experimental import pallas as pl
from jax.experimental.pallas import tpu as pltpu


def _round_up(n: int, m: int) -> int:
    return ((n + m - 1) // m) * m


def _cdiv(a: int, b: int) -> int:
    return (a + b - 1) // b


# Approximate live VMEM per batch row at these feature dims (x f32 512 B x 2 buffers,
# bf16 x copy 256 B, h1 f32+bf16 ~384 B, h2 f32+bf16 ~192 B, out f32 x 2 buffers ~64 B).
_VMEM_BYTES_PER_ROW = 2048
# Cap the batch tile so we stay comfortably under the 32 MiB scoped-VMEM default
# (the binding constraint on v7x, which has 64 MiB physical VMEM per TensorCore).
_MAX_TB = ((24 * 1024 * 1024 // _VMEM_BYTES_PER_ROW) // 128) * 128  # 12288


def _critic_kernel(x_ref, w1_ref, b1_ref, w2_ref, b2_ref, w3_ref, b3_ref, o_ref):
    # In-kernel bf16 cast of the streamed x tile (no separate wrapper-side HBM pass).
    x = x_ref[...].astype(jnp.bfloat16)                               # (tb, d_in)

    # Layer 1: contract the feature dims of (h0, d_in) x (tb, d_in) -> (h0, tb).
    # Batch lands on the lane axis, so every activation below is lane-dense.
    h = jax.lax.dot_general(
        w1_ref[...], x,
        dimension_numbers=(((1,), (1,)), ((), ())),
        preferred_element_type=jnp.float32)
    h = jnp.maximum(h + b1_ref[...], 0.0).astype(jnp.bfloat16)        # (h0, tb)

    # Layer 2: (h1, h0) @ (h0, tb) -> (h1, tb).
    h = jnp.dot(w2_ref[...], h, preferred_element_type=jnp.float32)
    h = jnp.maximum(h + b2_ref[...], 0.0).astype(jnp.bfloat16)        # (h1, tb)

    # Value head: (out_dim, h1) @ (h1, tb) -> (out_dim, tb); lane-dense store.
    v = jnp.dot(w3_ref[...], h, preferred_element_type=jnp.float32)
    o_ref[...] = (v + b3_ref[...]).astype(o_ref.dtype)


@functools.partial(jax.jit, static_argnames=("block_b",))
def critic_forward(state_vec, params, *, block_b: int = 8192):
    """state_vec: (B, input_dim) float.  Returns (B, output_dim) float32.

    params (PyTorch layouts, bf16 MXU operands):
      w1 (h0, in) bf16, b1 (h0, 1) f32, w2 (h1, h0) bf16, b2 (h1, 1) f32,
      w3 (out, h1) bf16, b3 (out, 1) f32.
    """
    w1, b1, w2, b2, w3, b3 = (params[k] for k in ("w1", "b1", "w2", "b2", "w3", "b3"))
    B, d_in = state_vec.shape
    d_h0 = w1.shape[0]
    d_h1 = w2.shape[0]
    out_dim = w3.shape[0]

    # Batch tile: multiple of 128 (batch maps onto lanes), capped for VMEM, and chosen so
    # that there are >= 2 grid steps whenever B allows (feeds both TensorCores on v7x).
    max_tb = min(block_b, _MAX_TB)
    half = _round_up(_cdiv(B, 2), 128)
    tb = max(128, min(max_tb, half))
    grid = (_cdiv(B, tb),)   # ragged last block allowed; no wrapper-side padding of x.

    flops = 2 * B * (d_in * d_h0 + d_h0 * d_h1 + d_h1 * out_dim)
    bytes_accessed = (
        B * d_in * state_vec.dtype.itemsize          # x stream
        + B * out_dim * 4                            # output
        + (d_in * d_h0 + d_h0 * d_h1 + d_h1 * out_dim) * 2  # bf16 weights
        + (d_h0 + d_h1 + out_dim) * 4                # f32 biases
    )

    out_t = pl.pallas_call(
        _critic_kernel,
        out_shape=jax.ShapeDtypeStruct((out_dim, B), jnp.float32),
        grid=grid,
        in_specs=[
            pl.BlockSpec((tb, d_in), lambda i: (i, 0)),       # streamed x tile (pipelined)
            pl.BlockSpec((d_h0, d_in), lambda i: (0, 0)),     # resident weights / biases
            pl.BlockSpec((d_h0, 1), lambda i: (0, 0)),
            pl.BlockSpec((d_h1, d_h0), lambda i: (0, 0)),
            pl.BlockSpec((d_h1, 1), lambda i: (0, 0)),
            pl.BlockSpec((out_dim, d_h1), lambda i: (0, 0)),
            pl.BlockSpec((out_dim, 1), lambda i: (0, 0)),
        ],
        out_specs=pl.BlockSpec((out_dim, tb), lambda i: (0, i)),
        compiler_params=pltpu.CompilerParams(dimension_semantics=("parallel",)),
        cost_estimate=pl.CostEstimate(
            flops=flops, transcendentals=0, bytes_accessed=bytes_accessed),
    )(state_vec, w1, b1, w2, b2, w3, b3)

    return out_t.T  # (B, out_dim) float32


def init_critic_params(key, input_dim, hidden_dim, output_dim):
    """Kaiming-uniform (a=0, relu) weights + zero biases, mirroring Critic._initialize_weights.
    Weights keep PyTorch's (out_features, in_features) layout, stored in bf16 (MXU operands);
    biases are f32 column vectors (broadcast along the lane/batch axis in-kernel)."""
    h0, h1 = hidden_dim
    keys = jax.random.split(key, 3)

    def kaiming(k, fan_in, shape):
        bound = math.sqrt(2.0) * math.sqrt(3.0 / fan_in)  # kaiming_uniform, a=0, relu gain
        return jax.random.uniform(k, shape, jnp.float32, minval=-bound, maxval=bound)

    return {
        "w1": kaiming(keys[0], input_dim, (h0, input_dim)).astype(jnp.bfloat16),
        "b1": jnp.zeros((h0, 1), jnp.float32),
        "w2": kaiming(keys[1], h0, (h1, h0)).astype(jnp.bfloat16),
        "b2": jnp.zeros((h1, 1), jnp.float32),
        "w3": kaiming(keys[2], h1, (output_dim, h1)).astype(jnp.bfloat16),
        "b3": jnp.zeros((output_dim, 1), jnp.float32),
    }


if __name__ == "__main__":
    input_dim = 32
    hidden_dim = (64, 32)
    output_dim = 1
    batch = 8

    key = jax.random.PRNGKey(0)
    k_param, k_x = jax.random.split(key)
    params = init_critic_params(k_param, input_dim, hidden_dim, output_dim)
    state_vec = jax.random.normal(k_x, (batch, input_dim), jnp.float32)

    out = critic_forward(state_vec, params)
    out = jax.block_until_ready(out)

    # Reference in plain JAX with the same bf16-operand / f32-accumulate path as the kernel.
    xb = state_vec.astype(jnp.bfloat16)
    h = jnp.maximum(
        jnp.dot(xb, params["w1"].T, preferred_element_type=jnp.float32) + params["b1"].T, 0.0
    ).astype(jnp.bfloat16)
    h = jnp.maximum(
        jnp.dot(h, params["w2"].T, preferred_element_type=jnp.float32) + params["b2"].T, 0.0
    ).astype(jnp.bfloat16)
    ref = jnp.dot(h, params["w3"].T, preferred_element_type=jnp.float32) + params["b3"].T

    assert out.shape == (batch, output_dim), out.shape
    assert jnp.allclose(out, ref, atol=1e-3, rtol=1e-3), float(jnp.max(jnp.abs(out - ref)))

    print("KERNEL_OK")
</pallas_src>

<mosaic_0001>
module attributes {stable_mosaic.version = 11 : i64} {
  func.func @_critic_kernel(%arg0: i32, %arg1: memref<128x32xf32, #tpu.memory_space<vmem>>, %arg2: memref<64x32xbf16, #tpu.memory_space<vmem>>, %arg3: memref<64x1xf32, #tpu.memory_space<vmem>>, %arg4: memref<32x64xbf16, #tpu.memory_space<vmem>>, %arg5: memref<32x1xf32, #tpu.memory_space<vmem>>, %arg6: memref<1x32xbf16, #tpu.memory_space<vmem>>, %arg7: memref<1x1xf32, #tpu.memory_space<vmem>>, %arg8: memref<1x128xf32, #tpu.memory_space<vmem>>) attributes {dimension_semantics = [#tpu.dimension_semantics<parallel>], iteration_bounds = array<i64: 1>, scalar_prefetch = 0 : i64, scratch_operands = 0 : i64, tpu.core_type = #tpu.core_type<tc>, window_params = [{transform_indices = @transform_0, window_bounds = array<i64: 128, 32>}, {pipeline_mode = #tpu.pipeline_mode<synchronous>, transform_indices = @transform_1, window_bounds = array<i64: 64, 32>}, {pipeline_mode = #tpu.pipeline_mode<synchronous>, transform_indices = @transform_2, window_bounds = array<i64: 64, 1>}, {pipeline_mode = #tpu.pipeline_mode<synchronous>, transform_indices = @transform_3, window_bounds = array<i64: 32, 64>}, {pipeline_mode = #tpu.pipeline_mode<synchronous>, transform_indices = @transform_4, window_bounds = array<i64: 32, 1>}, {pipeline_mode = #tpu.pipeline_mode<synchronous>, transform_indices = @transform_5, window_bounds = array<i64: 1, 32>}, {pipeline_mode = #tpu.pipeline_mode<synchronous>, transform_indices = @transform_6, window_bounds = array<i64: 1, 1>}, {transform_indices = @transform_7, window_bounds = array<i64: 1, 128>}]} {
    %c0 = arith.constant 0 : index
    %c0_0 = arith.constant 0 : index
    %0 = vector.load %arg1[%c0, %c0_0] : memref<128x32xf32, #tpu.memory_space<vmem>>, vector<128x32xf32>
    %1 = arith.truncf %0 : vector<128x32xf32> to vector<128x32xbf16>
    %c0_1 = arith.constant 0 : index
    %c0_2 = arith.constant 0 : index
    %2 = vector.load %arg2[%c0_1, %c0_2] : memref<64x32xbf16, #tpu.memory_space<vmem>>, vector<64x32xbf16>
    %cst = arith.constant dense<0.000000e+00> : vector<64x128xf32>
    %3 = tpu.matmul %2, %1, %cst {dimension_numbers = #tpu.dot_dimension_numbers<[1], [1], [0], [0], [0, 0, 1, 0], [], []>} : vector<64x32xbf16>, vector<128x32xbf16>, vector<64x128xf32> -> vector<64x128xf32>
    %c0_3 = arith.constant 0 : index
    %c0_4 = arith.constant 0 : index
    %4 = vector.load %arg3[%c0_3, %c0_4] : memref<64x1xf32, #tpu.memory_space<vmem>>, vector<64x1xf32>
    %5 = vector.broadcast %4 : vector<64x1xf32> to vector<64x128xf32>
    %6 = arith.addf %3, %5 : vector<64x128xf32>
    %cst_5 = arith.constant 0.000000e+00 : f32
    %7 = vector.broadcast %cst_5 : f32 to vector<64x128xf32>
    %8 = arith.maximumf %6, %7 : vector<64x128xf32>
    %9 = arith.truncf %8 : vector<64x128xf32> to vector<64x128xbf16>
    %c0_6 = arith.constant 0 : index
    %c0_7 = arith.constant 0 : index
    %10 = vector.load %arg4[%c0_6, %c0_7] : memref<32x64xbf16, #tpu.memory_space<vmem>>, vector<32x64xbf16>
    %cst_8 = arith.constant dense<0.000000e+00> : vector<32x128xf32>
    %11 = tpu.matmul %10, %9, %cst_8 {dimension_numbers = #tpu.dot_dimension_numbers<[1], [0], [0], [1], [0, 0, 1, 1], [], []>} : vector<32x64xbf16>, vector<64x128xbf16>, vector<32x128xf32> -> vector<32x128xf32>
    %c0_9 = arith.constant 0 : index
    %c0_10 = arith.constant 0 : index
    %12 = vector.load %arg5[%c0_9, %c0_10] : memref<32x1xf32, #tpu.memory_space<vmem>>, vector<32x1xf32>
    %13 = vector.broadcast %12 : vector<32x1xf32> to vector<32x128xf32>
    %14 = arith.addf %11, %13 : vector<32x128xf32>
    %cst_11 = arith.constant 0.000000e+00 : f32
    %15 = vector.broadcast %cst_11 : f32 to vector<32x128xf32>
    %16 = arith.maximumf %14, %15 : vector<32x128xf32>
    %17 = arith.truncf %16 : vector<32x128xf32> to vector<32x128xbf16>
    %c0_12 = arith.constant 0 : index
    %c0_13 = arith.constant 0 : index
    %18 = vector.load %arg6[%c0_12, %c0_13] : memref<1x32xbf16, #tpu.memory_space<vmem>>, vector<1x32xbf16>
    %cst_14 = arith.constant dense<0.000000e+00> : vector<1x128xf32>
    %19 = tpu.matmul %18, %17, %cst_14 {dimension_numbers = #tpu.dot_dimension_numbers<[1], [0], [0], [1], [0, 0, 1, 1], [], []>} : vector<1x32xbf16>, vector<32x128xbf16>, vector<1x128xf32> -> vector<1x128xf32>
    %c0_15 = arith.constant 0 : index
    %c0_16 = arith.constant 0 : index
    %20 = vector.load %arg7[%c0_15, %c0_16] : memref<1x1xf32, #tpu.memory_space<vmem>>, vector<1x1xf32>
    %21 = vector.broadcast %20 : vector<1x1xf32> to vector<1x128xf32>
    %22 = arith.addf %19, %21 : vector<1x128xf32>
    %c0_17 = arith.constant 0 : index
    %c0_18 = arith.constant 0 : index
    %23 = vector.load %arg8[%c0_17, %c0_18] : memref<1x128xf32, #tpu.memory_space<vmem>>, vector<1x128xf32>
    tpu.vector_store %arg8[%c0_17, %c0_18], %22 {strides = array<i32>} : memref<1x128xf32, #tpu.memory_space<vmem>>, vector<1x128xf32>,
    return
  }
  func.func @transform_0(%arg0: i32) -> (i32, i32) {
    %c0_i32 = arith.constant 0 : i32
    %c0_i32_0 = arith.constant 0 : i32
    return %arg0, %c0_i32 : i32, i32
  }
  func.func @transform_1(%arg0: i32) -> (i32, i32) {
    %c0_i32 = arith.constant 0 : i32
    %c0_i32_0 = arith.constant 0 : i32
    %c0_i32_1 = arith.constant 0 : i32
    return %c0_i32, %c0_i32_0 : i32, i32
  }
  func.func @transform_2(%arg0: i32) -> (i32, i32) {
    %c0_i32 = arith.constant 0 : i32
    %c0_i32_0 = arith.constant 0 : i32
    %c0_i32_1 = arith.constant 0 : i32
    return %c0_i32, %c0_i32_0 : i32, i32
  }
  func.func @transform_3(%arg0: i32) -> (i32, i32) {
    %c0_i32 = arith.constant 0 : i32
    %c0_i32_0 = arith.constant 0 : i32
    %c0_i32_1 = arith.constant 0 : i32
    return %c0_i32, %c0_i32_0 : i32, i32
  }
  func.func @transform_4(%arg0: i32) -> (i32, i32) {
    %c0_i32 = arith.constant 0 : i32
    %c0_i32_0 = arith.constant 0 : i32
    %c0_i32_1 = arith.constant 0 : i32
    return %c0_i32, %c0_i32_0 : i32, i32
  }
  func.func @transform_5(%arg0: i32) -> (i32, i32) {
    %c0_i32 = arith.constant 0 : i32
    %c0_i32_0 = arith.constant 0 : i32
    %c0_i32_1 = arith.constant 0 : i32
    return %c0_i32, %c0_i32_0 : i32, i32
  }
  func.func @transform_6(%arg0: i32) -> (i32, i32) {
    %c0_i32 = arith.constant 0 : i32
    %c0_i32_0 = arith.constant 0 : i32
    %c0_i32_1 = arith.constant 0 : i32
    return %c0_i32, %c0_i32_0 : i32, i32
  }
  func.func @transform_7(%arg0: i32) -> (i32, i32) {
    %c0_i32 = arith.constant 0 : i32
    %c0_i32_0 = arith.constant 0 : i32
    return %c0_i32, %arg0 : i32, i32
  }
}

</mosaic_0001>

<llo_original>
// kernel: critic_forward.1
$region0: #{critic_forward.1}
  #allocation0 [shape = 'u32[]', space=smem, size = 0x4, offset = 0x4, fixed_abs, tag = 'smem constant byte address 0x4 - core index']
  #allocation1 [shape = 'u32[144,128]{1,0:T(1,128)}', space=vmem, size = 0x12000, scoped, tag = 'internal scratch']
  #allocation2 [shape = 'f32[1,1]{1,0:T(1,128)S(1)}', space=vmem, size = 0x200, scoped, tag = 'scoped memory for critic_forward.1']
  %s0 = inlined_call_operand.vmem [shape: f32[8,32], index: 0, kind: input, shape index: {}]
  %s1 = inlined_call_operand.vmem [shape: bf16[64,32], index: 1, kind: input, shape index: {}]
  %s2 = inlined_call_operand.vmem [shape: f32[64,1], index: 2, kind: input, shape index: {}]
  %s3 = inlined_call_operand.vmem [shape: bf16[32,64], index: 3, kind: input, shape index: {}]
  %s4 = inlined_call_operand.vmem [shape: f32[32,1], index: 4, kind: input, shape index: {}]
  %s5 = inlined_call_operand.vmem [shape: bf16[1,32], index: 5, kind: input, shape index: {}]
  %s6 = inlined_call_operand.<no memory space> [shape: f32[1,1], index: 6, kind: input, shape index: {}]
  %s7 = inlined_call_operand.hbm [shape: f32[1,8], index: 7, kind: output, shape index: {}]
  %s8 = sld [smem:[#allocation0]]
  $region38: #{critic_forward.1} parent=0
    _
  %s10 = ssub.s32 1, %s8
  %s11 = scalar_select 0, %s10, %s8
  %v12 = vstv %s6
  %13 = vst [vmem:[#allocation2] sm:$0x1] %v12
  $region1: #{critic_forward.1} parent=0
    #allocation3 [shape = 'u8[512]{0}', space=vmem, size = 0x400, scoped, tag = 'output window, operand 0, single buffered']
    #allocation4 [shape = 's32[1]{0}', space=sflag, size = 0x4, scoped, tag = 'scoped memory for critic_forward.1']
    %14 = vsyncpa [#allocation4], 0
    // Predicated region
    $region2: #{critic_forward.1} parent=1 // pred_check
      _
    $region3: #{critic_forward.1} parent=1 // pred_check_branch
      %16 = sbr.rel (0) target = $region5
    $region4: #{critic_forward.1} parent=1 // pred_region
      _
    $region5: #{critic_forward.1} parent=1 // pred_fallthru
      _
    // Predicated region
    $region6: #{critic_forward.1} parent=1 // pred_check
      _
    $region7: #{critic_forward.1} parent=1 // pred_check_branch
      %18 = sbr.rel (0) target = $region9
    $region8: #{critic_forward.1} parent=1 // pred_region
      _
    $region9: #{critic_forward.1} parent=1 // pred_fallthru
      _
    // Predicated region
    $region10: #{critic_forward.1} parent=1 // pred_check
      _
    $region11: #{critic_forward.1} parent=1 // pred_check_branch
      %20 = sbr.rel (0) target = $region13
    $region12: #{critic_forward.1} parent=1 // pred_region
      _
    $region13: #{critic_forward.1} parent=1 // pred_fallthru
      _
    // Predicated region
    $region14: #{critic_forward.1} parent=1 // pred_check
      _
    $region15: #{critic_forward.1} parent=1 // pred_check_branch
      %22 = sbr.rel (0) target = $region17
    $region16: #{critic_forward.1} parent=1 // pred_region
      _
    $region17: #{critic_forward.1} parent=1 // pred_fallthru
      _
    // Predicated region
    $region18: #{critic_forward.1} parent=1 // pred_check
      _
    $region19: #{critic_forward.1} parent=1 // pred_check_branch
      %24 = sbr.rel (0) target = $region21
    $region20: #{critic_forward.1} parent=1 // pred_region
      _
    $region21: #{critic_forward.1} parent=1 // pred_fallthru
      _
    // Predicated region
    $region22: #{critic_forward.1} parent=1 // pred_check
      _
    $region23: #{critic_forward.1} parent=1 // pred_check_branch
      %26 = sbr.rel (0) target = $region25
    $region24: #{critic_forward.1} parent=1 // pred_region
      _
    $region25: #{critic_forward.1} parent=1 // pred_fallthru
      _
    // Predicated region
    $region26: #{critic_forward.1} parent=1 // pred_check
      _
    $region27: #{critic_forward.1} parent=1 // pred_check_branch
      %28 = sbr.rel (0) target = $region29
    $region28: #{critic_forward.1} parent=1 // pred_region
      _
    $region29: #{critic_forward.1} parent=1 // pred_fallthru
      _
    %v30 = vld [vmem:[%s0] sm:$0xff]
    %v31 = vld [vmem:[%s0 + $0x8] sm:$0xff]
    %v32 = vld [vmem:[%s0 + $0x10] sm:$0xff]
    %v33 = vld [vmem:[%s0 + $0x18] sm:$0xff]
    %v34 = vld [vmem:[%s0 + $0x20] sm:$0xff]
    %v35 = vld [vmem:[%s0 + $0x28] sm:$0xff]
    %v36 = vld [vmem:[%s0 + $0x30] sm:$0xff]
    %v37 = vld [vmem:[%s0 + $0x38] sm:$0xff]
    %v38 = vld [vmem:[%s0 + $0x40] sm:$0xff]
    %v39 = vld [vmem:[%s0 + $0x48] sm:$0xff]
    %v40 = vld [vmem:[%s0 + $0x50] sm:$0xff]
    %v41 = vld [vmem:[%s0 + $0x58] sm:$0xff]
    %v42 = vld [vmem:[%s0 + $0x60] sm:$0xff]
    %v43 = vld [vmem:[%s0 + $0x68] sm:$0xff]
    %v44 = vld [vmem:[%s0 + $0x70] sm:$0xff]
    %v45 = vld [vmem:[%s0 + $0x78] sm:$0xff]
    %v46 = vpack.c.bf16 %v31, %v30
    %v47 = vpack.c.bf16 %v33, %v32
    %v48 = vpack.c.bf16 %v35, %v34
    %v49 = vpack.c.bf16 %v37, %v36
    %v50 = vpack.c.bf16 %v39, %v38
    %v51 = vpack.c.bf16 %v41, %v40
    %v52 = vpack.c.bf16 %v43, %v42
    %v53 = vpack.c.bf16 %v45, %v44
    %v54 = vld [vmem:[%s1] sm:$0xf]
    %v55 = vld [vmem:[%s1 + $0x4] sm:$0xf]
    %v56 = vld [vmem:[%s1 + $0x8] sm:$0xf]
    %v57 = vld [vmem:[%s1 + $0xc] sm:$0xf]
    %v58 = vld [vmem:[%s1 + $0x10] sm:$0xf]
    %v59 = vld [vmem:[%s1 + $0x14] sm:$0xf]
    %v60 = vld [vmem:[%s1 + $0x18] sm:$0xf]
    %v61 = vld [vmem:[%s1 + $0x1c] sm:$0xf]
    %v62 = vld [vmem:[%s2] sm:$0xff]
    %v63 = vld [vmem:[%s2 + $0x8] sm:$0xff]
    %v64 = vld [vmem:[%s2 + $0x10] sm:$0xff]
    %v65 = vld [vmem:[%s2 + $0x18] sm:$0xff]
    %v66 = vld [vmem:[%s2 + $0x20] sm:$0xff]
    %v67 = vld [vmem:[%s2 + $0x28] sm:$0xff]
    %v68 = vld [vmem:[%s2 + $0x30] sm:$0xff]
    %v69 = vld [vmem:[%s2 + $0x38] sm:$0xff]
    %71 = vset.pattern.permute.xlu0 0
    %72 = vperm.xlu0 %71, %v62
    %v73 = vpop.permute.xlu0 %72
    %76 = vset.pattern.permute.xlu0 0
    %77 = vperm.xlu0 %76, %v63
    %v78 = vpop.permute.xlu0 %77
    %81 = vset.pattern.permute.xlu0 0
    %82 = vperm.xlu0 %81, %v64
    %v83 = vpop.permute.xlu0 %82
    %86 = vset.pattern.permute.xlu0 0
    %87 = vperm.xlu0 %86, %v65
    %v88 = vpop.permute.xlu0 %87
    %91 = vset.pattern.permute.xlu0 0
    %92 = vperm.xlu0 %91, %v66
    %v93 = vpop.permute.xlu0 %92
    %96 = vset.pattern.permute.xlu0 0
    %97 = vperm.xlu0 %96, %v67
    %v98 = vpop.permute.xlu0 %97
    %101 = vset.pattern.permute.xlu0 0
    %102 = vperm.xlu0 %101, %v68
    %v103 = vpop.permute.xlu0 %102
    %106 = vset.pattern.permute.xlu0 0
    %107 = vperm.xlu0 %106, %v69
    %v108 = vpop.permute.xlu0 %107
    %v118 = vunpack.c.l.b16 %v54
    %v119 = vunpack.c.l.b16 %v55
    %v120 = vunpack.c.l.b16 %v56
    %v121 = vunpack.c.l.b16 %v57
    %v122 = vunpack.c.l.b16 %v58
    %v123 = vunpack.c.l.b16 %v59
    %v124 = vunpack.c.l.b16 %v60
    %v125 = vunpack.c.l.b16 %v61
    %v126 = vpack.c.b16 %v119, %v118
    %v127 = vpack.c.b16 %v121, %v120
    %v128 = vpack.c.b16 %v123, %v122
    %v129 = vpack.c.b16 %v125, %v124
    %vm130 = vcmask 261120
    %v132 = vsel %vm130, %v126, 0
    %v135 = vsel %vm130, %v127, 0
    %v138 = vsel %vm130, %v128, 0
    %v141 = vsel %vm130, %v129, 0
    %v144 = vsel %vm130, %v46, 0
    %v147 = vsel %vm130, %v47, 0
    %v150 = vsel %vm130, %v48, 0
    %v153 = vsel %vm130, %v49, 0
    %v156 = vsel %vm130, %v50, 0
    %v159 = vsel %vm130, %v51, 0
    %v162 = vsel %vm130, %v52, 0
    %v165 = vsel %vm130, %v53, 0
    %167 = vmatprep.subr.bf16.mxu0 0
    %168 = vmatpush1.bf16.xpose.msra.mxu0 %v144
    %169 = vmatprep.subr.bf16.mxu0 0
    %170 = vmatpush1.bf16.xpose.msra.mxu0 %v147
    %171 = vmatprep.subr.bf16.mxu0 0
    %172 = vmatpush1.bf16.xpose.msra.mxu0 %v150
    %173 = vmatprep.subr.bf16.mxu0 0
    %174 = vmatpush1.bf16.xpose.msra.mxu0 %v153
    %175 = vmatprep.subr.bf16.mxu0 0
    %176 = vmatpush1.bf16.xpose.msra.mxu0 %v156
    %177 = vmatprep.subr.bf16.mxu0 0
    %178 = vmatpush1.bf16.xpose.msra.mxu0 %v159
    %179 = vmatprep.subr.bf16.mxu0 0
    %180 = vmatpush1.bf16.xpose.msra.mxu0 %v162
    %181 = vmatprep.subr.bf16.mxu0 0
    %182 = vmatpush1.bf16.xpose.msra.mxu0 %v165
    %183 = vmatprep.subr.bf16.mxu0 0
    %184 = vmatpush1.bf16.xpose.msra.mxu0 0
    %185 = vmatprep.subr.bf16.mxu0 0
    %186 = vmatpush1.bf16.xpose.msra.mxu0 0
    %187 = vmatprep.subr.bf16.mxu0 0
    %188 = vmatpush1.bf16.xpose.msra.mxu0 0
    %189 = vmatprep.subr.bf16.mxu0 0
    %190 = vmatpush1.bf16.xpose.msra.mxu0 0
    %191 = vmatprep.subr.bf16.mxu0 0
    %192 = vmatpush1.bf16.xpose.msra.mxu0 0
    %193 = vmatprep.subr.bf16.mxu0 0
    %194 = vmatpush1.bf16.xpose.msra.mxu0 0
    %195 = vmatprep.subr.bf16.mxu0 0
    %196 = vmatpush1.bf16.xpose.msra.mxu0 0
    %197 = vmatprep.subr.bf16.mxu0 0
    %198 = vmatpush1.bf16.xpose.msra.mxu0 0
    %199 = vmatprep.mubr.bf16.mxu0 0
    %200 = vmatmul.mubr.bf16.gmra.mrb[0].mxu0 %v132
    %v201 = vpop.f32.mrb[0].mxu0
    %v202 = vadd.f32 %v73, %v201
    %v203 = vpop.f32.mrb[0].mxu0
    %v204 = vpop.f32.mrb[0].mxu0
    %v205 = vadd.f32 %v78, %v204
    %v206 = vpop.f32.mrb[0].mxu0
    %207 = vmatprep.mubr.bf16.mxu0 0
    %208 = vmatmul.mubr.bf16.gmra.mrb[0].mxu0 %v135
    %v209 = vpop.f32.mrb[0].mxu0
    %v210 = vadd.f32 %v83, %v209
    %v211 = vpop.f32.mrb[0].mxu0
    %v212 = vpop.f32.mrb[0].mxu0
    %v213 = vadd.f32 %v88, %v212
    %v214 = vpop.f32.mrb[0].mxu0
    %215 = vmatprep.mubr.bf16.mxu0 0
    %216 = vmatmul.mubr.bf16.gmra.mrb[0].mxu0 %v138
    %v217 = vpop.f32.mrb[0].mxu0
    %v218 = vadd.f32 %v93, %v217
    %v219 = vpop.f32.mrb[0].mxu0
    %v220 = vpop.f32.mrb[0].mxu0
    %v221 = vadd.f32 %v98, %v220
    %v222 = vpop.f32.mrb[0].mxu0
    %223 = vmatprep.mubr.bf16.mxu0 0
    %224 = vmatmul.mubr.bf16.gmra.mrb[0].mxu0 %v141
    %v225 = vpop.f32.mrb[0].mxu0
    %v226 = vadd.f32 %v103, %v225
    %v227 = vpop.f32.mrb[0].mxu0
    %v228 = vpop.f32.mrb[0].mxu0
    %v229 = vadd.f32 %v108, %v228
    %v230 = vpop.f32.mrb[0].mxu0
    %231 = vdwg.mxu0
    %v232 = vmax.f32 %v202, 0.0
    %v233 = vmax.f32 %v205, 0.0
    %v234 = vmax.f32 %v210, 0.0
    %v235 = vmax.f32 %v213, 0.0
    %v236 = vmax.f32 %v218, 0.0
    %v237 = vmax.f32 %v221, 0.0
    %v238 = vmax.f32 %v226, 0.0
    %v239 = vmax.f32 %v229, 0.0
    %v240 = vpack.c.bf16 %v233, %v232
    %v241 = vpack.c.bf16 %v235, %v234
    %v242 = vpack.c.bf16 %v237, %v236
    %v243 = vpack.c.bf16 %v239, %v238
    %v244 = vld [vmem:[%s3] sm:$0xf]
    %v245 = vld [vmem:[%s3 + $0x4] sm:$0xf]
    %v246 = vld [vmem:[%s3 + $0x8] sm:$0xf]
    %v247 = vld [vmem:[%s3 + $0xc] sm:$0xf]
    %v248 = vld [vmem:[%s4] sm:$0xff]
    %v249 = vld [vmem:[%s4 + $0x8] sm:$0xff]
    %v250 = vld [vmem:[%s4 + $0x10] sm:$0xff]
    %v251 = vld [vmem:[%s4 + $0x18] sm:$0xff]
    %253 = vset.pattern.permute.xlu0 0
    %254 = vperm.xlu0 %253, %v248
    %v255 = vpop.permute.xlu0 %254
    %258 = vset.pattern.permute.xlu0 0
    %259 = vperm.xlu0 %258, %v249
    %v260 = vpop.permute.xlu0 %259
    %263 = vset.pattern.permute.xlu0 0
    %264 = vperm.xlu0 %263, %v250
    %v265 = vpop.permute.xlu0 %264
    %268 = vset.pattern.permute.xlu0 0
    %269 = vperm.xlu0 %268, %v251
    %v270 = vpop.permute.xlu0 %269
    %v276 = vunpack.c.l.b16 %v244
    %v277 = vunpack.c.l.b16 %v245
    %v278 = vunpack.c.l.b16 %v246
    %v279 = vunpack.c.l.b16 %v247
    %v280 = vpack.c.b16 %v277, %v276
    %v281 = vpack.c.b16 %v279, %v278
    %vm282 = vcmask 523264
    %v284 = vsel %vm282, %v280, 0
    %v287 = vsel %vm282, %v281, 0
    %289 = vmatprep.subr.bf16.mxu0 0
    %290 = vmatpush1.bf16.msra.mxu0 %v240
    %291 = vmatprep.subr.bf16.mxu0 0
    %292 = vmatpush1.bf16.msra.mxu0 %v241
    %293 = vmatprep.subr.bf16.mxu0 0
    %294 = vmatpush1.bf16.msra.mxu0 %v242
    %295 = vmatprep.subr.bf16.mxu0 0
    %296 = vmatpush1.bf16.msra.mxu0 %v243
    %297 = vmatprep.subr.bf16.mxu0 0
    %298 = vmatpush1.bf16.msra.mxu0 0
    %299 = vmatprep.subr.bf16.mxu0 0
    %300 = vmatpush1.bf16.msra.mxu0 0
    %301 = vmatprep.subr.bf16.mxu0 0
    %302 = vmatpush1.bf16.msra.mxu0 0
    %303 = vmatprep.subr.bf16.mxu0 0
    %304 = vmatpush1.bf16.msra.mxu0 0
    %305 = vmatprep.subr.bf16.mxu0 0
    %306 = vmatpush1.bf16.msra.mxu0 0
    %307 = vmatprep.subr.bf16.mxu0 0
    %308 = vmatpush1.bf16.msra.mxu0 0
    %309 = vmatprep.subr.bf16.mxu0 0
    %310 = vmatpush1.bf16.msra.mxu0 0
    %311 = vmatprep.subr.bf16.mxu0 0
    %312 = vmatpush1.bf16.msra.mxu0 0
    %313 = vmatprep.subr.bf16.mxu0 0
    %314 = vmatpush1.bf16.msra.mxu0 0
    %315 = vmatprep.subr.bf16.mxu0 0
    %316 = vmatpush1.bf16.msra.mxu0 0
    %317 = vmatprep.subr.bf16.mxu0 0
    %318 = vmatpush1.bf16.msra.mxu0 0
    %319 = vmatprep.subr.bf16.mxu0 0
    %320 = vmatpush1.bf16.msra.mxu0 0
    %321 = vmatprep.mubr.bf16.mxu0 0
    %322 = vmatmul.mubr.bf16.gmra.mrb[0].mxu0 %v284
    %v323 = vpop.f32.mrb[0].mxu0
    %v324 = vadd.f32 %v255, %v323
    %v325 = vpop.f32.mrb[0].mxu0
    %v326 = vpop.f32.mrb[0].mxu0
    %v327 = vadd.f32 %v260, %v326
    %v328 = vpop.f32.mrb[0].mxu0
    %329 = vmatprep.mubr.bf16.mxu0 0
    %330 = vmatmul.mubr.bf16.gmra.mrb[0].mxu0 %v287
    %v331 = vpop.f32.mrb[0].mxu0
    %v332 = vadd.f32 %v265, %v331
    %v333 = vpop.f32.mrb[0].mxu0
    %v334 = vpop.f32.mrb[0].mxu0
    %v335 = vadd.f32 %v270, %v334
    %v336 = vpop.f32.mrb[0].mxu0
    %337 = vdwg.mxu0
    %v338 = vmax.f32 %v324, 0.0
    %v339 = vmax.f32 %v327, 0.0
    %v340 = vmax.f32 %v332, 0.0
    %v341 = vmax.f32 %v335, 0.0
    %v342 = vpack.c.bf16 %v339, %v338
    %v343 = vpack.c.bf16 %v341, %v340
    %v344 = vld [vmem:[%s5] sm:$0x1]
    %v345 = vld [vmem:[#allocation2] sm:$0x1]
    %347 = vset.pattern.permute.xlu0 0
    %348 = vperm.xlu0 %347, %v345
    %v349 = vpop.permute.xlu0 %348
    %v351 = vlaneseq
    %v352 = vshrl.u32 %v351, 7
    %v353 = vsub.s32 0, %v352
    %v354 = vrot.slane %v349, %v353
    %v356 = vsel %vm130, %v344, 0
    %358 = vmatprep.subr.bf16.mxu0 0
    %359 = vmatpush1.bf16.msra.mxu0 %v342
    %360 = vmatprep.subr.bf16.mxu0 0
    %361 = vmatpush1.bf16.msra.mxu0 %v343
    %362 = vmatprep.subr.bf16.mxu0 0
    %363 = vmatpush1.bf16.msra.mxu0 0
    %364 = vmatprep.subr.bf16.mxu0 0
    %365 = vmatpush1.bf16.msra.mxu0 0
    %366 = vmatprep.subr.bf16.mxu0 0
    %367 = vmatpush1.bf16.msra.mxu0 0
    %368 = vmatprep.subr.bf16.mxu0 0
    %369 = vmatpush1.bf16.msra.mxu0 0
    %370 = vmatprep.subr.bf16.mxu0 0
    %371 = vmatpush1.bf16.msra.mxu0 0
    %372 = vmatprep.subr.bf16.mxu0 0
    %373 = vmatpush1.bf16.msra.mxu0 0
    %374 = vmatprep.subr.bf16.mxu0 0
    %375 = vmatpush1.bf16.msra.mxu0 0
    %376 = vmatprep.subr.bf16.mxu0 0
    %377 = vmatpush1.bf16.msra.mxu0 0
    %378 = vmatprep.subr.bf16.mxu0 0
    %379 = vmatpush1.bf16.msra.mxu0 0
    %380 = vmatprep.subr.bf16.mxu0 0
    %381 = vmatpush1.bf16.msra.mxu0 0
    %382 = vmatprep.subr.bf16.mxu0 0
    %383 = vmatpush1.bf16.msra.mxu0 0
    %384 = vmatprep.subr.bf16.mxu0 0
    %385 = vmatpush1.bf16.msra.mxu0 0
    %386 = vmatprep.subr.bf16.mxu0 0
    %387 = vmatpush1.bf16.msra.mxu0 0
    %388 = vmatprep.subr.bf16.mxu0 0
    %389 = vmatpush1.bf16.msra.mxu0 0
    %390 = vmatprep.mubr.bf16.mxu0 0
    %391 = vmatmul.mubr.bf16.gmra.mrb[0].mxu0 %v356
    %v392 = vpop.f32.mrb[0].mxu0
    %v393 = vadd.f32 %v354, %v392
    %v394 = vpop.f32.mrb[0].mxu0
    %v395 = vpop.f32.mrb[0].mxu0
    %v396 = vpop.f32.mrb[0].mxu0
    %397 = vdwg.mxu0
    %398 = vst [vmem:[#allocation3] sm:$0x1] %v393
    // Predicated region
    $region30: #{critic_forward.1} parent=1 // pred_check
      _
    $region31: #{critic_forward.1} parent=1 // pred_check_branch
      %400 = sbr.rel (0) target = $region33
    $region32: #{critic_forward.1} parent=1 // pred_region
      %s402 = ssub.s32 16, 16
      %403 = vsyncadd [#allocation4], %s402
      %s405 = sshll.u32 [#allocation3], 4
      %s406 = int_to_ptr.vmem [resolvable:$true] %s405
      %408 = dma.vmem_to_hbm [thread:$0]  %s406, 16, %s7, [#allocation4]
    $region33: #{critic_forward.1} parent=1 // pred_fallthru
      _
    // Predicated region
    $region34: #{critic_forward.1} parent=1 // pred_check
      _
    $region35: #{critic_forward.1} parent=1 // pred_check_branch
      %410 = sbr.rel (0) target = $region37
    $region36: #{critic_forward.1} parent=1 // pred_region
      %411 = dma.done [#allocation4], 16
    $region37: #{critic_forward.1} parent=1 // pred_fallthru
      _
    %412 = vsyncpa [#allocation4], 1

</llo_original>
